<compile_context>
chip_gen: v5e
topology: v5e:2x2
jax: 0.10.0
libtpu: 0.0.40
codegen_flags: <defaults>
</compile_context>

<pallas_src>
import math

import numpy as np
import jax
import jax.numpy as jnp
from jax import lax
from jax.experimental import pallas as pl
from jax.experimental.pallas import tpu as pltpu


# ---------------------------------------------------------------------------
# Fused kernel: Bt batch items per grid step, all Bt*S*S pair logits in one row.
# ---------------------------------------------------------------------------
def pairs_kernel(x_ref, wxt_ref, mask_ref, c_ref, out_ref):
    # x_ref:    (Bt*S, E)         Bt batch items, utterance rows flattened
    # wxt_ref:  (2, E)            [w_left_x ; w_right_x], pre-transposed (resident)
    # mask_ref: (2*Bt*S, Bt*S*S)  precomputed 0/1 block-diagonal selection mask (resident)
    # c_ref:    (1, 1) in SMEM    folded pos-embedding + bias constant
    # out_ref:  (1, 1, Bt*S*S)    lane-dense logits row
    # One MXU call, contraction over E, no in-kernel transpose:
    #   uvT[0, r] = <x_r, w_left_x>,  uvT[1, r] = <x_r, w_right_x>
    uvT = lax.dot_general(
        wxt_ref[...], x_ref[...],
        dimension_numbers=(((1,), (1,)), ((), ())),
        preferred_element_type=jnp.float32)                       # (2, Bt*S)

    combined = jnp.concatenate([uvT[0:1, :], uvT[1:2, :]], axis=1)  # (1, 2*Bt*S) = [u | v]

    # Single fused selection matmul:
    #   flat[0, t*S*S + i*S + j] = u[t*S + i] + v[t*S + j]
    flat = jnp.dot(combined, mask_ref[...], preferred_element_type=jnp.float32)

    out_ref[0] = flat + c_ref[0, 0]


# ---------------------------------------------------------------------------
# One-time parameter packing (param-load time, plain numpy)
# ---------------------------------------------------------------------------
def pack_for_kernel(params, seq_len, batch_size):
    pos_emb = np.asarray(params["pos_emb"])          # (max_seq_len, P)
    W = np.asarray(params["fc_w"])                   # (1, 2D)
    b = np.asarray(params["fc_b"])                   # (1,)
    P = pos_emb.shape[1]
    D = W.shape[1] // 2
    E = D - P
    # PyTorch does pos_emb_layer(seq_len): only valid while seq_len < max_seq_len.
    assert seq_len < pos_emb.shape[0], "pos-emb lookup at index seq_len needs seq_len < max_seq_len"

    w = W[0]
    w_left, w_right = w[:D], w[D:]
    # x-part of [left, right], stored transposed so the kernel's first dot needs no XLU transpose.
    wxT = np.stack([w_left[:E], w_right[:E]], axis=0).astype(np.float32)        # (2, E)
    # Positional-embedding contribution + bias is identical for every pair -> one scalar.
    pos_row = pos_emb[seq_len]
    c = float(pos_row @ w_left[E:] + pos_row @ w_right[E:] + b[0])
    c_arr = np.full((1, 1), c, np.float32)

    # Batch-block size: smallest Bt making Bt*S*S a multiple of 128 (lane-dense store),
    # capped by the batch and a small bound so padding/mask size stay tiny.
    ss = seq_len * seq_len
    Bt = max(1, 128 // math.gcd(ss, 128))
    Bt = min(Bt, max(1, batch_size), 8)

    # Stacked block-diagonal selection mask (grid/batch-invariant constant):
    #   rows [0, Bt*S)        pick u[t*S+i] into output t*S*S + i*S + j
    #   rows [Bt*S, 2*Bt*S)   pick v[t*S+j] into output t*S*S + i*S + j
    n = Bt * seq_len
    out_len = Bt * ss
    mask = np.zeros((2 * n, out_len), np.float32)
    p = np.arange(out_len)
    t = p // ss
    i = (p % ss) // seq_len
    j = p % seq_len
    mask[t * seq_len + i, p] = 1.0
    mask[n + t * seq_len + j, p] = 1.0

    return dict(wxT=jnp.asarray(wxT), mask=jnp.asarray(mask), c=jnp.asarray(c_arr))


# ---------------------------------------------------------------------------
# Forward (one jit containing all per-call plumbing + the pallas_call)
# ---------------------------------------------------------------------------
@jax.jit
def _forward_impl(x, wxT, mask, c):
    B, S, E = x.shape
    ss = S * S
    Bt = mask.shape[0] // (2 * S)
    out_len = Bt * ss
    G = (B + Bt - 1) // Bt
    Bpad = G * Bt

    if Bpad != B:
        x = jnp.pad(x, ((0, Bpad - B), (0, 0), (0, 0)))
    x2 = x.reshape(Bpad * S, E)          # contiguous collapse, free

    out3 = pl.pallas_call(
        pairs_kernel,
        out_shape=jax.ShapeDtypeStruct((G, 1, out_len), jnp.float32),
        grid=(G,),
        in_specs=[
            pl.BlockSpec((Bt * S, E), lambda g: (g, 0)),          # per-step input rows
            pl.BlockSpec((2, E), lambda g: (0, 0)),               # packed weights (resident)
            pl.BlockSpec((2 * Bt * S, out_len), lambda g: (0, 0)),  # selection mask (resident)
            pl.BlockSpec(memory_space=pltpu.MemorySpace.SMEM),    # scalar pos+bias constant
        ],
        out_specs=pl.BlockSpec((1, 1, out_len), lambda g: (g, 0, 0)),
        compiler_params=pltpu.CompilerParams(
            dimension_semantics=("parallel",),
            vmem_limit_bytes=32 * 1024 * 1024,                    # sized against v7x's 64 MiB VMEM
        ),
    )(x2, wxT, mask, c)

    return out3.reshape(Bpad, ss)[:B]    # contiguous reinterpretation + slice off padding


def pairs_classifier_forward(input_embeddings, convo_len, packed):
    # convo_len accepted for signature fidelity but (as in the PyTorch forward) never used.
    del convo_len
    return _forward_impl(input_embeddings, packed["wxT"], packed["mask"], packed["c"])


# ---------------------------------------------------------------------------
# Parameter init (deterministic, mirrors the PyTorch module's initializers)
# ---------------------------------------------------------------------------
def init_params(key, max_seq_len, pos_emb_dim, input_emb_dim):
    D = input_emb_dim + pos_emb_dim
    k1, k2, k3 = jax.random.split(key, 3)
    # nn.Embedding(max_seq_len, pos_emb_dim) with xavier_uniform_
    limit = float(np.sqrt(6.0 / (max_seq_len + pos_emb_dim)))
    pos_emb = jax.random.uniform(k1, (max_seq_len, pos_emb_dim), jnp.float32, -limit, limit)
    # nn.Linear(2D, 1) default init
    bound = 1.0 / float(np.sqrt(2 * D))
    fc_w = jax.random.uniform(k2, (1, 2 * D), jnp.float32, -bound, bound)
    fc_b = jax.random.uniform(k3, (1,), jnp.float32, -bound, bound)
    return dict(pos_emb=pos_emb, fc_w=fc_w, fc_b=fc_b)


# ---------------------------------------------------------------------------
# Pure-JAX reference (literal translation of couple_generator + linear classifier)
# ---------------------------------------------------------------------------
def pairs_classifier_reference(x, params):
    B, S, E = x.shape
    P = params["pos_emb"].shape[1]
    pos = jnp.broadcast_to(params["pos_emb"][S], (B, S, P))
    ext = jnp.concatenate([x, pos], axis=-1)                   # (B, S, D)
    p_left = jnp.repeat(ext, S, axis=1)                        # (B, S*S, D): ext[b, i]
    p_right = jnp.tile(ext, (1, S, 1))                         # (B, S*S, D): ext[b, j]
    pairs = jnp.concatenate([p_left, p_right], axis=-1)        # (B, S*S, 2D)
    pred = jnp.sum(pairs * params["fc_w"][0], axis=-1) + params["fc_b"][0]
    return pred                                                # (B, S*S)


# ---------------------------------------------------------------------------
if __name__ == "__main__":
    B, S = 4, 8                 # batch, seq_len (B=4 -> Bt=2, grid=2: both v7x TCs busy)
    E, P = 32, 16               # input_dim_transformer, pos_emb_dim
    MAX_SEQ_LEN = 16            # max_convo_len (> S so the pos lookup at index S is valid)

    key = jax.random.PRNGKey(0)
    k_x, k_p = jax.random.split(key)

    input_embeddings = jax.random.normal(k_x, (B, S, E), jnp.float32)
    convo_len = jnp.full((B,), S, jnp.int32)
    params = init_params(k_p, MAX_SEQ_LEN, P, E)

    packed = pack_for_kernel(params, S, B)      # once, at parameter-load time

    out = pairs_classifier_forward(input_embeddings, convo_len, packed)
    jax.block_until_ready(out)
    assert out.shape == (B, S * S)

    ref = pairs_classifier_reference(input_embeddings, params)
    np.testing.assert_allclose(np.asarray(out), np.asarray(ref), rtol=1e-3, atol=1e-3)

    print("KERNEL_OK")
</pallas_src>

<mosaic_0001>
module attributes {stable_mosaic.version = 11 : i64} {
  func.func @pairs_kernel(%arg0: i32, %arg1: memref<16x32xf32, #tpu.memory_space<vmem>>, %arg2: memref<2x32xf32, #tpu.memory_space<vmem>>, %arg3: memref<32x128xf32, #tpu.memory_space<vmem>>, %arg4: memref<1x1xf32, #tpu.memory_space<smem>>, %arg5: memref<1x1x128xf32, #tpu.memory_space<vmem>>) attributes {dimension_semantics = [#tpu.dimension_semantics<parallel>], iteration_bounds = array<i64: 2>, scalar_prefetch = 0 : i64, scratch_operands = 0 : i64, tpu.core_type = #tpu.core_type<tc>, window_params = [{transform_indices = @transform_0, window_bounds = array<i64: 16, 32>}, {pipeline_mode = #tpu.pipeline_mode<synchronous>, transform_indices = @transform_1, window_bounds = array<i64: 2, 32>}, {pipeline_mode = #tpu.pipeline_mode<synchronous>, transform_indices = @transform_2, window_bounds = array<i64: 32, 128>}, {transform_indices = @transform_3, window_bounds = array<i64: 1, 1>}, {transform_indices = @transform_4, window_bounds = array<i64: 1, 1, 128>}]} {
    %c0 = arith.constant 0 : index
    %c0_0 = arith.constant 0 : index
    %0 = vector.load %arg2[%c0, %c0_0] : memref<2x32xf32, #tpu.memory_space<vmem>>, vector<2x32xf32>
    %c0_1 = arith.constant 0 : index
    %c0_2 = arith.constant 0 : index
    %1 = vector.load %arg1[%c0_1, %c0_2] : memref<16x32xf32, #tpu.memory_space<vmem>>, vector<16x32xf32>
    %cst = arith.constant dense<0.000000e+00> : vector<2x16xf32>
    %2 = tpu.matmul %0, %1, %cst {dimension_numbers = #tpu.dot_dimension_numbers<[1], [1], [0], [0], [0, 0, 1, 0], [], []>} : vector<2x32xf32>, vector<16x32xf32>, vector<2x16xf32> -> vector<2x16xf32>
    %3 = vector.extract_strided_slice %2 {offsets = [0, 0], sizes = [1, 16], strides = [1, 1]} : vector<2x16xf32> to vector<1x16xf32>
    %4 = vector.extract_strided_slice %2 {offsets = [1, 0], sizes = [1, 16], strides = [1, 1]} : vector<2x16xf32> to vector<1x16xf32>
    %5 = tpu.concatenate %3, %4 in 1 : vector<1x16xf32>, vector<1x16xf32> -> vector<1x32xf32>
    %c0_3 = arith.constant 0 : index
    %c0_4 = arith.constant 0 : index
    %6 = vector.load %arg3[%c0_3, %c0_4] : memref<32x128xf32, #tpu.memory_space<vmem>>, vector<32x128xf32>
    %cst_5 = arith.constant dense<0.000000e+00> : vector<1x128xf32>
    %7 = tpu.matmul %5, %6, %cst_5 {dimension_numbers = #tpu.dot_dimension_numbers<[1], [0], [0], [1], [0, 0, 1, 1], [], []>} : vector<1x32xf32>, vector<32x128xf32>, vector<1x128xf32> -> vector<1x128xf32>
    %c0_6 = arith.constant 0 : index
    %c0_7 = arith.constant 0 : index
    %8 = memref.load %arg4[%c0_6, %c0_7] : memref<1x1xf32, #tpu.memory_space<smem>>
    %9 = vector.broadcast %8 : f32 to vector<1x128xf32>
    %10 = arith.addf %7, %9 : vector<1x128xf32>
    %c0_8 = arith.constant 0 : index
    %c0_9 = arith.constant 0 : index
    %c0_10 = arith.constant 0 : index
    %11 = vector.load %arg5[%c0_8, %c0_9, %c0_10] : memref<1x1x128xf32, #tpu.memory_space<vmem>>, vector<1x1x128xf32>
    %12 = vector.shape_cast %11 : vector<1x1x128xf32> to vector<1x128xf32>
    %13 = vector.shape_cast %10 : vector<1x128xf32> to vector<1x1x128xf32>
    tpu.vector_store %arg5[%c0_8, %c0_9, %c0_10], %13 {strides = array<i32>} : memref<1x1x128xf32, #tpu.memory_space<vmem>>, vector<1x1x128xf32>,
    return
  }
  func.func @transform_0(%arg0: i32) -> (i32, i32) {
    %c0_i32 = arith.constant 0 : i32
    %c0_i32_0 = arith.constant 0 : i32
    return %arg0, %c0_i32 : i32, i32
  }
  func.func @transform_1(%arg0: i32) -> (i32, i32) {
    %c0_i32 = arith.constant 0 : i32
    %c0_i32_0 = arith.constant 0 : i32
    %c0_i32_1 = arith.constant 0 : i32
    return %c0_i32, %c0_i32_0 : i32, i32
  }
  func.func @transform_2(%arg0: i32) -> (i32, i32) {
    %c0_i32 = arith.constant 0 : i32
    %c0_i32_0 = arith.constant 0 : i32
    %c0_i32_1 = arith.constant 0 : i32
    return %c0_i32, %c0_i32_0 : i32, i32
  }
  func.func @transform_3(%arg0: i32) -> (i32, i32) {
    %c0_i32 = arith.constant 0 : i32
    %c0_i32_0 = arith.constant 0 : i32
    %c0_i32_1 = arith.constant 0 : i32
    return %c0_i32, %c0_i32_0 : i32, i32
  }
  func.func @transform_4(%arg0: i32) -> (i32, i32, i32) {
    %c0_i32 = arith.constant 0 : i32
    %c0_i32_0 = arith.constant 0 : i32
    %c0_i32_1 = arith.constant 0 : i32
    return %arg0, %c0_i32, %c0_i32_0 : i32, i32, i32
  }
}

</mosaic_0001>

<llo_original>
// kernel: _forward_impl.1
$region0: #{_forward_impl.1}
  #allocation0 [shape = 'u32[]', space=smem, size = 0x4, offset = 0x4, fixed_abs, tag = 'smem constant byte address 0x4 - core index']
  #allocation1 [shape = 'u32[72,128]{1,0:T(1,128)}', space=vmem, size = 0x9000, scoped, tag = 'internal scratch']
  #allocation2 [shape = 'f32[1,1]{1,0:T(1,128)S(6)}', space=smem, size = 0x200, scoped, tag = 'scoped memory for _forward_impl.1']
  %s0 = inlined_call_operand.hbm [shape: f32[32,32], index: 0, kind: input, shape index: {}]
  %s1 = inlined_call_operand.vmem [shape: f32[2,32], index: 1, kind: input, shape index: {}]
  %s2 = inlined_call_operand.hbm [shape: f32[32,128], index: 2, kind: input, shape index: {}]
  %s3 = inlined_call_operand.<no memory space> [shape: f32[1,1], index: 3, kind: input, shape index: {}]
  %s4 = inlined_call_operand.vmem [shape: f32[2,1,128], index: 4, kind: output, shape index: {}]
  %s5 = sld [smem:[#allocation0]]
  $region57: #{_forward_impl.1} parent=0
    _
  %s7 = ssub.s32 1, %s5
  %s8 = scalar_select 0, %s7, %s5
  %9 = sst [smem:[#allocation2]] %s3
  $region1: #{_forward_impl.1} parent=0
    #allocation3 [shape = 'u8[16384]{0}', space=vmem, size = 0x4000, scoped, tag = 'input window, operand 0']
    #allocation4 [shape = 's32[2]{0}', space=sflag, size = 0x8, scoped, tag = 'scoped memory for _forward_impl.1']
    #allocation5 [shape = 'u8[16384]{0}', space=vmem, size = 0x4000, scoped, tag = 'input window, operand 2, single buffered']
    #allocation6 [shape = 's32[1]{0}', space=sflag, size = 0x4, scoped, tag = 'scoped memory for _forward_impl.1']
    %10 = vsyncpa [#allocation4], 0
    %s11 = scalar_lea.sflag [#allocation4], 1
    %12 = vsyncpa %s11, 0
    %13 = vsyncpa [#allocation6], 0
    loop: start=0, step=1, limit=4
    $region2: #{_forward_impl.1} parent=1 // loop_pre_header
      _
    $region3: #{_forward_impl.1} parent=1 // loop_header
      %s15 = sphi 0, %s19
      %p16 = scmp.ge.s32.totalorder %s15, 4
      %s25 = sphi 0, %s27
      %s28 = sphi 0, %s25
      %s29 = sphi 0, %s28
      %s45 = sphi 0, %s29
      %s49 = sphi 0, %s49
      %s51 = sphi 0, %s49
      %s52 = sphi 0, %s51
      %s66 = sphi 0, %s52
      %s70 = sphi 0, %s70
      %s72 = sphi 0, %s70
      %s73 = sphi 0, %s72
      %s87 = sphi 0, %s73
      %s91 = sphi 0, %s91
      %s93 = sphi 0, %s91
      %s94 = sphi 0, %s93
      %s108 = sphi 0, %s94
      %s114 = sphi 0, %s116
      %s117 = sphi 0, %s114
      %s118 = sphi 0, %s117
      %s134 = sphi 0, %s118
    $region4: #{_forward_impl.1} parent=1 // loop_header_branch
      %18 = sbr.rel (%p16) target = $region8
    $region5: #{_forward_impl.1} parent=1 // loop_body
      %s20 = ssub.s32 %s15, 1
      %s21 = ssub.s32 %s15, 2
      %s22 = sadd.s32 %s15, 1
      %s23 = ssub.s32 %s15, %s22
      %p24 = scmp.eq.s32.totalorder %s23, 0
      %s26 = sadd.s32 %s25, 1
      %s27 = scalar_select %p24, %s25, %s26
      %p30 = pneg %p24
      %p31 = scmp.eq.s32.totalorder %s15, 1
      %p32 = por %p30, %p31
      %p33 = scmp.ne.s32.totalorder %s25, %s28
      %p34 = scmp.eq.s32.totalorder %s15, 0
      %p35 = por %p33, %p34
      %p36 = scmp.ne.s32.totalorder %s25, %s28
      %p37 = scmp.eq.s32.totalorder %s20, 1
      %p38 = por %p36, %p37
      %p39 = scmp.ne.s32.totalorder %s28, %s29
      %p40 = scmp.eq.s32.totalorder %s20, 0
      %p41 = por %p39, %p40
      %p42 = scmp.ne.s32.totalorder %s28, %s29
      %p43 = scmp.eq.s32.totalorder %s21, 1
      %p44 = por %p42, %p43
      %p46 = scmp.ne.s32.totalorder %s29, %s45
      %p47 = scmp.eq.s32.totalorder %s21, 0
      %p48 = por %p46, %p47
      %s50 = sadd.s32 %s49, 1
      %p53 = scmp.eq.s32.totalorder %s15, 1
      %p54 = scmp.ne.s32.totalorder %s49, %s51
      %p55 = scmp.eq.s32.totalorder %s15, 0
      %p56 = por %p54, %p55
      %p57 = scmp.ne.s32.totalorder %s49, %s51
      %p58 = scmp.eq.s32.totalorder %s20, 1
      %p59 = por %p57, %p58
      %p60 = scmp.ne.s32.totalorder %s51, %s52
      %p61 = scmp.eq.s32.totalorder %s20, 0
      %p62 = por %p60, %p61
      %p63 = scmp.ne.s32.totalorder %s51, %s52
      %p64 = scmp.eq.s32.totalorder %s21, 1
      %p65 = por %p63, %p64
      %p67 = scmp.ne.s32.totalorder %s52, %s66
      %p68 = scmp.eq.s32.totalorder %s21, 0
      %p69 = por %p67, %p68
      %s71 = sadd.s32 %s70, 1
      %p74 = scmp.eq.s32.totalorder %s15, 1
      %p75 = scmp.ne.s32.totalorder %s70, %s72
      %p76 = scmp.eq.s32.totalorder %s15, 0
      %p77 = por %p75, %p76
      %p78 = scmp.ne.s32.totalorder %s70, %s72
      %p79 = scmp.eq.s32.totalorder %s20, 1
      %p80 = por %p78, %p79
      %p81 = scmp.ne.s32.totalorder %s72, %s73
      %p82 = scmp.eq.s32.totalorder %s20, 0
      %p83 = por %p81, %p82
      %p84 = scmp.ne.s32.totalorder %s72, %s73
      %p85 = scmp.eq.s32.totalorder %s21, 1
      %p86 = por %p84, %p85
      %p88 = scmp.ne.s32.totalorder %s73, %s87
      %p89 = scmp.eq.s32.totalorder %s21, 0
      %p90 = por %p88, %p89
      %s92 = sadd.s32 %s91, 1
      %p95 = scmp.eq.s32.totalorder %s15, 1
      %p96 = scmp.ne.s32.totalorder %s91, %s93
      %p97 = scmp.eq.s32.totalorder %s15, 0
      %p98 = por %p96, %p97
      %p99 = scmp.ne.s32.totalorder %s91, %s93
      %p100 = scmp.eq.s32.totalorder %s20, 1
      %p101 = por %p99, %p100
      %p102 = scmp.ne.s32.totalorder %s93, %s94
      %p103 = scmp.eq.s32.totalorder %s20, 0
      %p104 = por %p102, %p103
      %p105 = scmp.ne.s32.totalorder %s93, %s94
      %p106 = scmp.eq.s32.totalorder %s21, 1
      %p107 = por %p105, %p106
      %p109 = scmp.ne.s32.totalorder %s94, %s108
      %p110 = scmp.eq.s32.totalorder %s21, 0
      %p111 = por %p109, %p110
      %s112 = ssub.s32 %s15, %s22
      %p113 = scmp.eq.s32.totalorder %s112, 0
      %s115 = sadd.s32 %s114, 1
      %s116 = scalar_select %p113, %s114, %s115
      %p119 = pneg %p113
      %p120 = scmp.eq.s32.totalorder %s15, 1
      %p121 = por %p119, %p120
      %p122 = scmp.ne.s32.totalorder %s114, %s117
      %p123 = scmp.eq.s32.totalorder %s15, 0
      %p124 = por %p122, %p123
      %p125 = scmp.ne.s32.totalorder %s114, %s117
      %p126 = scmp.eq.s32.totalorder %s20, 1
      %p127 = por %p125, %p126
      %p128 = scmp.ne.s32.totalorder %s117, %s118
      %p129 = scmp.eq.s32.totalorder %s20, 0
      %p130 = por %p128, %p129
      %p131 = scmp.ne.s32.totalorder %s117, %s118
      %p132 = scmp.eq.s32.totalorder %s21, 1
      %p133 = por %p131, %p132
      %p135 = scmp.ne.s32.totalorder %s118, %s134
      %p136 = scmp.eq.s32.totalorder %s21, 0
      %p137 = por %p135, %p136
      %p138 = scmp.le.s32.totalorder 1, %s15
      %p139 = scmp.lt.s32.totalorder %s15, 3
      %p140 = pnand %p138, %p139
      %p141 = pneg %p140
      // Predicated region
      $region9: #{_forward_impl.1} parent=5 // pred_check
        _
      $region10: #{_forward_impl.1} parent=5 // pred_check_branch
        %143 = sbr.rel (%p140) target = $region12
      $region11: #{_forward_impl.1} parent=5 // pred_region
        %s144 = ssub.s32 %s15, 1
        // Predicated region
        $region13: #{_forward_impl.1} parent=11 // pred_check
          %p145 = pneg %p62
        $region14: #{_forward_impl.1} parent=11 // pred_check_branch
          %147 = sbr.rel (%p145) target = $region16
        $region15: #{_forward_impl.1} parent=11 // pred_region
          _
        $region16: #{_forward_impl.1} parent=11 // pred_fallthru
          _
        // Predicated region
        $region17: #{_forward_impl.1} parent=11 // pred_check
          %p148 = pneg %p83
        $region18: #{_forward_impl.1} parent=11 // pred_check_branch
          %150 = sbr.rel (%p148) target = $region20
        $region19: #{_forward_impl.1} parent=11 // pred_region
          %152 = vsyncadd [#allocation6], 0
          %s153 = sshll.u32 %s2, 4
          %s154 = int_to_ptr.hbm [resolvable:$true] %s153
          %s155 = sshll.u32 [#allocation5], 4
          %s156 = int_to_ptr.vmem [resolvable:$true] %s155
          %161 = dma.hbm_to_vmem [thread:$0]  %s154, 512, %s156, [#allocation6], 128, 128, 8
        $region20: #{_forward_impl.1} parent=11 // pred_fallthru
          _
        // Predicated region
        $region21: #{_forward_impl.1} parent=11 // pred_check
          %p162 = pneg %p104
        $region22: #{_forward_impl.1} parent=11 // pred_check_branch
          %164 = sbr.rel (%p162) target = $region24
        $region23: #{_forward_impl.1} parent=11 // pred_region
          _
        $region24: #{_forward_impl.1} parent=11 // pred_fallthru
          _
      $region12: #{_forward_impl.1} parent=5 // pred_fallthru
        _
      %p165 = scmp.lt.s32.totalorder %s15, 2
      // Predicated region
      $region25: #{_forward_impl.1} parent=5 // pred_check
        %p166 = pneg %p165
      $region26: #{_forward_impl.1} parent=5 // pred_check_branch
        %168 = sbr.rel (%p166) target = $region28
      $region27: #{_forward_impl.1} parent=5 // pred_region
        // Predicated region
        $region29: #{_forward_impl.1} parent=27 // pred_check
          %p169 = pneg %p35
        $region30: #{_forward_impl.1} parent=27 // pred_check_branch
          %171 = sbr.rel (%p169) target = $region32
        $region31: #{_forward_impl.1} parent=27 // pred_region
          %s172 = sand.u32 %s25, 1
          %s173 = scalar_lea.sflag [#allocation4], %s172
          %s174 = sand.u32 %s25, 1
          %s175 = smul.addr %s174, 16
          %s176 = scalar_lea.vmem [#allocation3], %s175
          %s177 = smul.u32 2, %s15
          %179 = vsyncadd %s173, 0
          %s180 = smul.addr %s177, 8
          %s181 = scalar_lea.hbm %s0, %s180
          %s182 = sshll.u32 %s181, 4
          %s183 = int_to_ptr.hbm [resolvable:$true] %s182
          %s184 = sshll.u32 %s176, 4
          %s185 = int_to_ptr.vmem [resolvable:$true] %s184
          %190 = dma.hbm_to_vmem [thread:$0]  %s183, 256, %s185, %s173, 128, 128, 8
        $region32: #{_forward_impl.1} parent=27 // pred_fallthru
          _
      $region28: #{_forward_impl.1} parent=5 // pred_fallthru
        _
      %p191 = scmp.le.s32.totalorder 1, %s15
      %p192 = scmp.lt.s32.totalorder %s15, 3
      %p193 = pnand %p191, %p192
      %p194 = pneg %p193
      // Predicated region
      $region33: #{_forward_impl.1} parent=5 // pred_check
        _
      $region34: #{_forward_impl.1} parent=5 // pred_check_branch
        %196 = sbr.rel (%p193) target = $region36
      $region35: #{_forward_impl.1} parent=5 // pred_region
        %s197 = ssub.s32 %s15, 1
        %s198 = sand.u32 %s28, 1
        %s199 = scalar_lea.sflag [#allocation4], %s198
        %s200 = sand.u32 %s28, 1
        %s201 = smul.addr %s200, 16
        %s202 = scalar_lea.vmem [#allocation3], %s201
        // Predicated region
        $region37: #{_forward_impl.1} parent=35 // pred_check
          %p203 = pneg %p41
        $region38: #{_forward_impl.1} parent=35 // pred_check_branch
          %205 = sbr.rel (%p203) target = $region40
        $region39: #{_forward_impl.1} parent=35 // pred_region
          %207 = dma.done %s199, 256
        $region40: #{_forward_impl.1} parent=35 // pred_fallthru
          _
        // Predicated region
        $region41: #{_forward_impl.1} parent=35 // pred_check
          %p208 = pneg %p83
        $region42: #{_forward_impl.1} parent=35 // pred_check_branch
          %210 = sbr.rel (%p208) target = $region44
        $region43: #{_forward_impl.1} parent=35 // pred_region
          %212 = dma.done [#allocation6], 512
        $region44: #{_forward_impl.1} parent=35 // pred_fallthru
          _
        %s213 = sand.u32 %s28, 1
        %s214 = scalar_lea.sflag [#allocation4], %s213
        %s215 = sand.u32 %s28, 1
        %s216 = smul.addr %s215, 16
        %s217 = scalar_lea.vmem [#allocation3], %s216
        %p218 = pneg %p41
        %p219 = pneg %p38
        %p220 = pneg %p62
        %p221 = pneg %p59
        %p222 = pneg %p83
        %p223 = pneg %p80
        %p224 = pneg %p104
        %p225 = pneg %p101
        %p226 = pneg %p130
        %p227 = pneg %p127
        %p228 = scmp.lt.s32.totalorder %s20, 1
        %s229 = scalar_select %p228, %s20, 1
        %s230 = scalar_lea.vmem %s4, %s229
        %s231 = smul.u32 2, %s20
        %p232 = scmp.lt.s32.totalorder %s20, 1
        %s233 = scalar_select %p232, %s20, 1
        %s234 = scalar_lea.vmem %s4, %s233
        %v235 = vld [vmem:[%s1] sm:$0x3]
        %v236 = vld [vmem:[%s202] sm:$0xff]
        %v237 = vld [vmem:[%s202 + $0x8] sm:$0xff]
        %vm238 = vcmask 261120
        %v240 = vsel %vm238, %v235, 0
        %v243 = vsel %vm238, %v236, 0
        %v246 = vsel %vm238, %v237, 0
        %248 = vmatpush.xpose.msra.mxu0 0.0
        %249 = vmatpush.xpose.msra.mxu0 0.0
        %250 = vmatpush.xpose.msra.mxu0 0.0
        %251 = vmatpush.xpose.msra.mxu0 0.0
        %252 = vmatpush.xpose.msra.mxu0 0.0
        %253 = vmatpush.xpose.msra.mxu0 0.0
        %254 = vmatpush.xpose.msra.mxu0 0.0
        %255 = vmatpush.xpose.msra.mxu0 0.0
        %256 = vmatpush.xpose.msra.mxu0 0.0
        %257 = vmatpush.xpose.msra.mxu0 0.0
        %258 = vmatpush.xpose.msra.mxu0 0.0
        %259 = vmatpush.xpose.msra.mxu0 0.0
        %260 = vmatpush.xpose.msra.mxu0 0.0
        %261 = vmatpush.xpose.msra.mxu0 0.0
        %262 = vmatpush.xpose.msra.mxu0 %v246
        %263 = vmatpush.xpose.msra.mxu0 %v243
        %264 = vmatmul.f32.gmra.mxu0 %v240
        %v265 = vpop.f32.mrf.mxu0
        %v266 = vadd.f32 0.0, %v265
        %267 = vdwg.mxu0
        %v269 = vrot.slane %v266, 1
        %270 = vrot.lane.b32.xlu0 %v269, 16
        %v271 = vpop.permute.xlu0 %270
        %vm273 = vcmask 130048
        %v274 = vsel %vm273, %v266, %v271
        %v275 = vld [vmem:[#allocation5] sm:$0xff]
        %v276 = vld [vmem:[#allocation5 + $0x8] sm:$0xff]
        %v277 = vld [vmem:[#allocation5 + $0x10] sm:$0xff]
        %v278 = vld [vmem:[#allocation5 + $0x18] sm:$0xff]
        %s279 = sld [smem:[#allocation2]]
        %v280 = vstv %s279
        %v282 = vsel %vm238, %v274, 0
        %284 = vmatpush.msra.mxu0 0.0
        %285 = vmatpush.msra.mxu0 0.0
        %286 = vmatpush.msra.mxu0 0.0
        %287 = vmatpush.msra.mxu0 0.0
        %288 = vmatpush.msra.mxu0 0.0
        %289 = vmatpush.msra.mxu0 0.0
        %290 = vmatpush.msra.mxu0 0.0
        %291 = vmatpush.msra.mxu0 0.0
        %292 = vmatpush.msra.mxu0 0.0
        %293 = vmatpush.msra.mxu0 0.0
        %294 = vmatpush.msra.mxu0 0.0
        %295 = vmatpush.msra.mxu0 0.0
        %296 = vmatpush.msra.mxu0 %v278
        %297 = vmatpush.msra.mxu0 %v277
        %298 = vmatpush.msra.mxu0 %v276
        %299 = vmatpush.msra.mxu0 %v275
        %300 = vmatmul.f32.gmra.mxu0 %v282
        %v301 = vpop.f32.mrf.mxu0
        %v302 = vadd.f32 %v280, %v301
        %303 = vdwg.mxu0
        %304 = vst [vmem:[%s234] sm:$0x1] %v302
        %p305 = scmp.lt.s32.totalorder %s20, 1
        %s306 = scalar_select %p305, %s20, 1
        %s307 = scalar_lea.vmem %s4, %s306
        // Predicated region
        $region45: #{_forward_impl.1} parent=35 // pred_check
          %p308 = pneg %p127
        $region46: #{_forward_impl.1} parent=35 // pred_check_branch
          %310 = sbr.rel (%p308) target = $region48
        $region47: #{_forward_impl.1} parent=35 // pred_region
          _
        $region48: #{_forward_impl.1} parent=35 // pred_fallthru
          _
      $region36: #{_forward_impl.1} parent=5 // pred_fallthru
        _
      %p311 = scmp.le.s32.totalorder 2, %s15
      // Predicated region
      $region49: #{_forward_impl.1} parent=5 // pred_check
        %p312 = pneg %p311
      $region50: #{_forward_impl.1} parent=5 // pred_check_branch
        %314 = sbr.rel (%p312) target = $region52
      $region51: #{_forward_impl.1} parent=5 // pred_region
        %s315 = ssub.s32 %s15, 2
        // Predicated region
        $region53: #{_forward_impl.1} parent=51 // pred_check
          %p316 = pneg %p133
        $region54: #{_forward_impl.1} parent=51 // pred_check_branch
          %318 = sbr.rel (%p316) target = $region56
        $region55: #{_forward_impl.1} parent=51 // pred_region
          %p319 = scmp.lt.s32.totalorder %s21, 1
          %s320 = scalar_select %p319, %s21, 1
          %s321 = scalar_lea.vmem %s4, %s320
        $region56: #{_forward_impl.1} parent=51 // pred_fallthru
          _
      $region52: #{_forward_impl.1} parent=5 // pred_fallthru
        _
    $region6: #{_forward_impl.1} parent=1 // loop_footer
      %s19 = sadd.s32 1, %s15
    $region7: #{_forward_impl.1} parent=1 // loop_footer_branch
      %14 = sbr.rel target = $region3
    $region8: #{_forward_impl.1} parent=1 // loop_exit
      _
    %322 = vsyncpa [#allocation4], 1
    %s323 = scalar_lea.sflag [#allocation4], 1
    %324 = vsyncpa %s323, 1
    %325 = vsyncpa [#allocation6], 1

</llo_original>
